<compile_context>
chip_gen: v7x
topology: tpu7x:2x2x1
jax: 0.10.0
libtpu: 0.0.40
codegen_flags: <defaults>
</compile_context>

<pallas_src>
import jax
import jax.numpy as jnp
from jax.experimental import pallas as pl
from jax.experimental.pallas import tpu as pltpu


def _copy_tile_kernel(x_ref, o_ref):
    # x_ref / o_ref: (TB, TL) lane-dense tiles — pure copy.
    o_ref[...] = x_ref[...]


def _copy_batch_kernel(x_ref, o_ref):
    # Fallback path: x_ref is (1, 1, H, W) (batch b, channel 0); o_ref is (1, H, W).
    o_ref[...] = x_ref[0]


def _pick_lane_tile(L, itemsize, tile_bytes_target):
    """Largest multiple of 128 that divides L and keeps an 8-row tile <= target."""
    max_tl = max(128, (tile_bytes_target // (8 * itemsize)) // 128 * 128)
    if L <= max_tl:
        return L
    best = 128
    d = (max_tl // 128) * 128
    while d >= 128:
        if L % d == 0:
            best = d
            break
        d -= 128
    return best


def block_extraction(x, *, tile_bytes_target=2 * 1024 * 1024):
    """Pallas equivalent of `x[:, 0]` for a tensor of shape (B, C, *rest)."""
    assert x.ndim >= 2, "BlockExtraction expects at least a (B, C, ...) tensor"
    B, C = x.shape[0], x.shape[1]
    rest = x.shape[2:]
    L = 1
    for d in rest:
        L *= d
    itemsize = x.dtype.itemsize
    out_shape = (B,) + tuple(rest)

    if L % 128 == 0 and L > 0:
        # ---------------- Fast path: lane-dense flattened view ----------------
        # Free reshape for contiguous data: row b == [ch0 | ch1 | ... | ch(C-1)].
        x2 = x.reshape(B, C * L)

        TL = _pick_lane_tile(L, itemsize, tile_bytes_target)

        # Batch (sublane) tile: fold batches up to the byte target.
        tb = max(8, tile_bytes_target // (TL * itemsize))
        TB = B if tb >= B else (tb // 8) * 8

        grid = (pl.cdiv(B, TB), L // TL)
        out2 = pl.pallas_call(
            _copy_tile_kernel,
            out_shape=jax.ShapeDtypeStruct((B, L), x.dtype),
            grid_spec=pltpu.PrefetchScalarGridSpec(
                num_scalar_prefetch=0,
                grid=grid,
                # Column-block index l only ranges over [0, L) -> channel 0 only;
                # each batch row is a single contiguous run for the DMA engine.
                in_specs=[pl.BlockSpec((TB, TL), lambda b, l: (b, l))],
                out_specs=pl.BlockSpec((TB, TL), lambda b, l: (b, l)),
            ),
            compiler_params=pltpu.CompilerParams(
                dimension_semantics=("parallel", "parallel"),
            ),
        )(x2)
        return out2.reshape(out_shape)

    # ------------- Fallback: trailing size not lane-aligned (rare) -------------
    # Normalize trailing dims to (H, W) so the full (H, W) block equals the
    # array dims and the layout rules hold for any H, W.
    if len(rest) == 0:
        H, W = 1, 1
    elif len(rest) == 1:
        H, W = 1, rest[0]
    else:
        H, W = int(jnp.prod(jnp.array(rest[:-1]))), rest[-1]
    x4 = x.reshape(B, C, H, W)

    out3 = pl.pallas_call(
        _copy_batch_kernel,
        out_shape=jax.ShapeDtypeStruct((B, H, W), x.dtype),
        grid_spec=pltpu.PrefetchScalarGridSpec(
            num_scalar_prefetch=0,
            grid=(B,),
            in_specs=[pl.BlockSpec((1, 1, H, W), lambda b: (b, 0, 0, 0))],
            out_specs=pl.BlockSpec((1, H, W), lambda b: (b, 0, 0)),
        ),
        compiler_params=pltpu.CompilerParams(
            dimension_semantics=("parallel",),
        ),
    )(x4)
    return out3.reshape(out_shape)


if __name__ == "__main__":
    key = jax.random.PRNGKey(0)
    x = jax.random.normal(key, (2, 4, 16, 16), dtype=jnp.float32)

    out = block_extraction(x)
    out = jax.block_until_ready(out)

    # Reference check: x[:, 0]
    ref = x[:, 0]
    assert out.shape == ref.shape, (out.shape, ref.shape)
    assert out.dtype == ref.dtype
    assert bool(jnp.array_equal(out, ref))

    print("KERNEL_OK")
</pallas_src>

<mosaic_0001>
module attributes {stable_mosaic.version = 11 : i64} {
  func.func @_copy_tile_kernel(%arg0: i32, %arg1: i32, %arg2: memref<2x256xf32, #tpu.memory_space<vmem>>, %arg3: memref<2x256xf32, #tpu.memory_space<vmem>>) attributes {dimension_semantics = [#tpu.dimension_semantics<parallel>, #tpu.dimension_semantics<parallel>], iteration_bounds = array<i64: 1, 1>, scalar_prefetch = 0 : i64, scratch_operands = 0 : i64, tpu.core_type = #tpu.core_type<tc>, window_params = [{transform_indices = @transform_0, window_bounds = array<i64: 2, 256>}, {transform_indices = @transform_1, window_bounds = array<i64: 2, 256>}]} {
    %c0 = arith.constant 0 : index
    %c0_0 = arith.constant 0 : index
    %0 = vector.load %arg2[%c0, %c0_0] : memref<2x256xf32, #tpu.memory_space<vmem>>, vector<2x256xf32>
    %c0_1 = arith.constant 0 : index
    %c0_2 = arith.constant 0 : index
    %1 = vector.load %arg3[%c0_1, %c0_2] : memref<2x256xf32, #tpu.memory_space<vmem>>, vector<2x256xf32>
    tpu.vector_store %arg3[%c0_1, %c0_2], %0 {strides = array<i32>} : memref<2x256xf32, #tpu.memory_space<vmem>>, vector<2x256xf32>,
    return
  }
  func.func @transform_0(%arg0: i32, %arg1: i32) -> (i32, i32) {
    %c0_i32 = arith.constant 0 : i32
    return %arg0, %arg1 : i32, i32
  }
  func.func @transform_1(%arg0: i32, %arg1: i32) -> (i32, i32) {
    %c0_i32 = arith.constant 0 : i32
    return %arg0, %arg1 : i32, i32
  }
}

</mosaic_0001>

<llo_original>
// kernel: tpu_custom_call.1
$region0: #{tpu_custom_call.1}
  #allocation0 [shape = 'u32[]', space=smem, size = 0x4, offset = 0x4, fixed_abs, tag = 'smem constant byte address 0x4 - core index']
  #allocation1 [shape = 'u32[144,128]{1,0:T(1,128)}', space=vmem, size = 0x12000, scoped, tag = 'internal scratch']
  %s0 = inlined_call_operand.hbm [shape: f32[2,1024], index: 0, kind: input, shape index: {}]
  %s1 = inlined_call_operand.hbm [shape: f32[2,256], index: 1, kind: output, shape index: {}]
  %s2 = sld [smem:[#allocation0]]
  $region18: #{tpu_custom_call.1} parent=0
    _
  %s4 = ssub.s32 1, %s2
  %s5 = scalar_select 0, %s4, %s2
  $region1: #{tpu_custom_call.1} parent=0
    #allocation2 [shape = 'u8[2048]{0}', space=vmem, size = 0x800, scoped, tag = 'input window, operand 0, single buffered']
    #allocation3 [shape = 's32[1]{0}', space=sflag, size = 0x4, scoped, tag = 'scoped memory for tpu_custom_call.1']
    #allocation4 [shape = 's32[1]{0}', space=sflag, size = 0x4, scoped, tag = 'scoped memory for tpu_custom_call.1']
    #allocation5 [shape = 'u8[2048]{0}', space=vmem, size = 0x800, scoped, tag = 'output window, operand 0, single buffered']
    %6 = vsyncpa [#allocation3], 0
    %7 = vsyncpa [#allocation4], 0
    // Predicated region
    $region2: #{tpu_custom_call.1} parent=1 // pred_check
      _
    $region3: #{tpu_custom_call.1} parent=1 // pred_check_branch
      %9 = sbr.rel (0) target = $region5
    $region4: #{tpu_custom_call.1} parent=1 // pred_region
      %s11 = ssub.s32 64, 64
      %12 = vsyncadd [#allocation3], %s11
      %s14 = sshll.u32 [#allocation2], 4
      %s15 = int_to_ptr.vmem [resolvable:$true] %s14
      %17 = dma.hbm_to_vmem [thread:$0]  %s0, 64, %s15, [#allocation3]
    $region5: #{tpu_custom_call.1} parent=1 // pred_fallthru
      _
    // Predicated region
    $region6: #{tpu_custom_call.1} parent=1 // pred_check
      _
    $region7: #{tpu_custom_call.1} parent=1 // pred_check_branch
      %19 = sbr.rel (0) target = $region9
    $region8: #{tpu_custom_call.1} parent=1 // pred_region
      %20 = dma.done [#allocation3], 64
    $region9: #{tpu_custom_call.1} parent=1 // pred_fallthru
      _
    %v21 = vld [vmem:[#allocation2] sm:$0xf]
    %22 = vst [vmem:[#allocation5] sm:$0xf] %v21
    // Predicated region
    $region10: #{tpu_custom_call.1} parent=1 // pred_check
      _
    $region11: #{tpu_custom_call.1} parent=1 // pred_check_branch
      %24 = sbr.rel (0) target = $region13
    $region12: #{tpu_custom_call.1} parent=1 // pred_region
      %s26 = ssub.s32 64, 64
      %27 = vsyncadd [#allocation4], %s26
      %s29 = sshll.u32 [#allocation5], 4
      %s30 = int_to_ptr.vmem [resolvable:$true] %s29
      %32 = dma.vmem_to_hbm [thread:$0]  %s30, 64, %s1, [#allocation4]
    $region13: #{tpu_custom_call.1} parent=1 // pred_fallthru
      _
    // Predicated region
    $region14: #{tpu_custom_call.1} parent=1 // pred_check
      _
    $region15: #{tpu_custom_call.1} parent=1 // pred_check_branch
      %34 = sbr.rel (0) target = $region17
    $region16: #{tpu_custom_call.1} parent=1 // pred_region
      %35 = dma.done [#allocation4], 64
    $region17: #{tpu_custom_call.1} parent=1 // pred_fallthru
      _
    %36 = vsyncpa [#allocation3], 1
    %37 = vsyncpa [#allocation4], 1

</llo_original>
